<compile_context>
chip_gen: v7x
topology: tpu7x:2x2x1
jax: 0.10.0
libtpu: 0.0.40
codegen_flags: <defaults>
</compile_context>

<pallas_src>
import jax
import jax.numpy as jnp
from jax.experimental import pallas as pl
from jax.experimental.pallas import tpu as pltpu

HIDDEN = 768   # bert-base-chinese hidden_size
MID = 64
BATCH = 2


def ranknet_kernel(cls0_ref, cls1_ref, w1_ref, b1_ref, w2row_ref, b2_ref,
                   out_ref):
    w1 = w1_ref[...]

    # Two back-to-back matmuls through the MXU.  Re-pushing the tiny 768x64
    # W1 is far cheaper than stacking both branches into a VMEM scratch
    # (which would saturate the single vector-store slot and pin ~1.5 MiB).
    h0 = jnp.dot(cls0_ref[...], w1, preferred_element_type=jnp.float32)
    h1 = jnp.dot(cls1_ref[...], w1, preferred_element_type=jnp.float32)

    b1v = b1_ref[...].astype(jnp.float32)
    h0 = jnp.maximum(h0 + b1v, 0.0)          # shared_nn ReLU (shared weights)
    h1 = jnp.maximum(h1 + b1v, 0.0)
    d = h0 - h1                              # [tm, MID] f32

    # N=1 second matmul -> VPU multiply + XLU lane reduction (MXU stays idle
    # for a single output column).  b2 is a scalar read from SMEM.
    w2v = w2row_ref[...].astype(jnp.float32)
    logit = jnp.sum(d * w2v, axis=-1, keepdims=True) + b2_ref[0]
    out_ref[...] = jax.nn.sigmoid(logit).astype(out_ref.dtype)


def ranknet_forward(cls0, cls1, w1, b1, w2, b2, *, tm=None):
    """cls0/cls1: [B, H] pooled [CLS] (f32 or bf16); w1: [H, MID] (PyTorch
       weight.T); b1: [1, MID]; w2: [MID, 1]; b2: [1, 1].
       Returns [B, 1] f32 sigmoid scores."""
    B, H = cls0.shape
    M = w1.shape[1]

    # Sublane-packing multiple: 8 rows/vreg for f32, 16 for bf16.
    sub = 16 if cls0.dtype == jnp.bfloat16 else 8

    if tm is None:
        tm = min(B, 1024)                    # big tiles: DMA dominates overhead
        if B >= 2 * sub:
            # v7x has 2 TensorCores; keep >= 2 grid steps so the "parallel"
            # batch axis can shard across them (no-op on v5e/v6e).
            tm = min(tm, pl.cdiv(B, 2))
        if tm >= sub:
            tm = (tm // sub) * sub           # keep (8,128)/(16,128)-aligned tiles
    tm = max(1, min(tm, B))

    # Ragged batch: pad up to a multiple of tm (keeps pipelining + bounded
    # per-step VMEM) instead of one giant single-step tile.
    B_pad = pl.cdiv(B, tm) * tm
    if B_pad != B:
        pad = ((0, B_pad - B), (0, 0))
        cls0 = jnp.pad(cls0, pad)
        cls1 = jnp.pad(cls1, pad)
    grid = (B_pad // tm,)

    w2_row = w2.reshape(1, M)                # [1, MID] for VPU mul + lane reduce
    b2_s = b2.reshape(1).astype(jnp.float32)  # scalar bias -> SMEM

    out = pl.pallas_call(
        ranknet_kernel,
        out_shape=jax.ShapeDtypeStruct((B_pad, 1), jnp.float32),
        grid=grid,
        in_specs=[
            pl.BlockSpec((tm, H), lambda i: (i, 0)),            # cls0 tile
            pl.BlockSpec((tm, H), lambda i: (i, 0)),            # cls1 tile
            pl.BlockSpec((H, M), lambda i: (0, 0)),             # W1 (resident)
            pl.BlockSpec((1, M), lambda i: (0, 0)),             # b1 (resident)
            pl.BlockSpec((1, M), lambda i: (0, 0)),             # w2 row (resident)
            pl.BlockSpec(memory_space=pltpu.MemorySpace.SMEM),  # b2 scalar
        ],
        out_specs=pl.BlockSpec((tm, 1), lambda i: (i, 0)),
        compiler_params=pltpu.CompilerParams(
            dimension_semantics=("parallel",)),   # shards batch tiles on v7x
    )(cls0, cls1, w1, b1, w2_row, b2_s)

    return out[:B]


def _ref_head(cls0, cls1, w1, b1, w2, b2):
    h0 = jnp.maximum(cls0.astype(jnp.float32) @ w1.astype(jnp.float32) + b1, 0.0)
    h1 = jnp.maximum(cls1.astype(jnp.float32) @ w1.astype(jnp.float32) + b1, 0.0)
    return jax.nn.sigmoid((h0 - h1) @ w2 + b2)


if __name__ == "__main__":
    key = jax.random.PRNGKey(0)
    k_cls0, k_cls1, k_w1, k_b1, k_w2, k_b2, k_big = jax.random.split(key, 7)

    # Synthetic pooled [CLS] embeddings (stand-ins for BERT pooler outputs).
    cls0 = jax.random.normal(k_cls0, (BATCH, HIDDEN), dtype=jnp.float32)
    cls1 = jax.random.normal(k_cls1, (BATCH, HIDDEN), dtype=jnp.float32)

    # Deterministic parameter init (uniform, nn.Linear default range).
    lim1 = 1.0 / (HIDDEN ** 0.5)
    w1 = jax.random.uniform(k_w1, (HIDDEN, MID), jnp.float32, -lim1, lim1)
    b1 = jax.random.uniform(k_b1, (1, MID), jnp.float32, -lim1, lim1)
    lim2 = 1.0 / (MID ** 0.5)
    w2 = jax.random.uniform(k_w2, (MID, 1), jnp.float32, -lim2, lim2)
    b2 = jax.random.uniform(k_b2, (1, 1), jnp.float32, -lim2, lim2)

    # Main run (f32, matches the f32 PyTorch head exactly).
    out = ranknet_forward(cls0, cls1, w1, b1, w2, b2)
    out = jax.block_until_ready(out)
    ref = _ref_head(cls0, cls1, w1, b1, w2, b2)
    assert out.shape == (BATCH, 1)
    assert jnp.allclose(out, ref, atol=1e-5), (out, ref)

    # Secondary check: ragged batch exercises the padded multi-step grid path.
    Bq = 20
    c0 = jax.random.normal(k_big, (Bq, HIDDEN), dtype=jnp.float32)
    c1 = -c0 * 0.5 + 0.1
    out2 = jax.block_until_ready(ranknet_forward(c0, c1, w1, b1, w2, b2))
    ref2 = _ref_head(c0, c1, w1, b1, w2, b2)
    assert out2.shape == (Bq, 1)
    assert jnp.allclose(out2, ref2, atol=1e-5), (out2, ref2)

    print("KERNEL_OK")
</pallas_src>

<mosaic_0001>
module attributes {stable_mosaic.version = 11 : i64} {
  func.func @ranknet_kernel(%arg0: i32, %arg1: memref<2x768xf32, #tpu.memory_space<vmem>>, %arg2: memref<2x768xf32, #tpu.memory_space<vmem>>, %arg3: memref<768x64xf32, #tpu.memory_space<vmem>>, %arg4: memref<1x64xf32, #tpu.memory_space<vmem>>, %arg5: memref<1x64xf32, #tpu.memory_space<vmem>>, %arg6: memref<1xf32, #tpu.memory_space<smem>>, %arg7: memref<2x1xf32, #tpu.memory_space<vmem>>) attributes {dimension_semantics = [#tpu.dimension_semantics<parallel>], iteration_bounds = array<i64: 1>, scalar_prefetch = 0 : i64, scratch_operands = 0 : i64, tpu.core_type = #tpu.core_type<tc>, window_params = [{transform_indices = @transform_0, window_bounds = array<i64: 2, 768>}, {transform_indices = @transform_1, window_bounds = array<i64: 2, 768>}, {pipeline_mode = #tpu.pipeline_mode<synchronous>, transform_indices = @transform_2, window_bounds = array<i64: 768, 64>}, {pipeline_mode = #tpu.pipeline_mode<synchronous>, transform_indices = @transform_3, window_bounds = array<i64: 1, 64>}, {pipeline_mode = #tpu.pipeline_mode<synchronous>, transform_indices = @transform_4, window_bounds = array<i64: 1, 64>}, {transform_indices = @transform_5, window_bounds = array<i64: 1>}, {transform_indices = @transform_6, window_bounds = array<i64: 2, 1>}]} {
    %c0 = arith.constant 0 : index
    %c0_0 = arith.constant 0 : index
    %0 = vector.load %arg3[%c0, %c0_0] : memref<768x64xf32, #tpu.memory_space<vmem>>, vector<768x64xf32>
    %c0_1 = arith.constant 0 : index
    %c0_2 = arith.constant 0 : index
    %1 = vector.load %arg1[%c0_1, %c0_2] : memref<2x768xf32, #tpu.memory_space<vmem>>, vector<2x768xf32>
    %cst = arith.constant dense<0.000000e+00> : vector<2x64xf32>
    %2 = tpu.matmul %1, %0, %cst {dimension_numbers = #tpu.dot_dimension_numbers<[1], [0], [0], [1], [0, 0, 1, 1], [], []>} : vector<2x768xf32>, vector<768x64xf32>, vector<2x64xf32> -> vector<2x64xf32>
    %c0_3 = arith.constant 0 : index
    %c0_4 = arith.constant 0 : index
    %3 = vector.load %arg2[%c0_3, %c0_4] : memref<2x768xf32, #tpu.memory_space<vmem>>, vector<2x768xf32>
    %cst_5 = arith.constant dense<0.000000e+00> : vector<2x64xf32>
    %4 = tpu.matmul %3, %0, %cst_5 {dimension_numbers = #tpu.dot_dimension_numbers<[1], [0], [0], [1], [0, 0, 1, 1], [], []>} : vector<2x768xf32>, vector<768x64xf32>, vector<2x64xf32> -> vector<2x64xf32>
    %c0_6 = arith.constant 0 : index
    %c0_7 = arith.constant 0 : index
    %5 = vector.load %arg4[%c0_6, %c0_7] : memref<1x64xf32, #tpu.memory_space<vmem>>, vector<1x64xf32>
    %6 = vector.broadcast %5 : vector<1x64xf32> to vector<2x64xf32>
    %7 = arith.addf %2, %6 : vector<2x64xf32>
    %cst_8 = arith.constant 0.000000e+00 : f32
    %8 = vector.broadcast %cst_8 : f32 to vector<2x64xf32>
    %9 = arith.maximumf %7, %8 : vector<2x64xf32>
    %10 = vector.broadcast %5 : vector<1x64xf32> to vector<2x64xf32>
    %11 = arith.addf %4, %10 : vector<2x64xf32>
    %cst_9 = arith.constant 0.000000e+00 : f32
    %12 = vector.broadcast %cst_9 : f32 to vector<2x64xf32>
    %13 = arith.maximumf %11, %12 : vector<2x64xf32>
    %14 = arith.subf %9, %13 : vector<2x64xf32>
    %c0_10 = arith.constant 0 : index
    %c0_11 = arith.constant 0 : index
    %15 = vector.load %arg5[%c0_10, %c0_11] : memref<1x64xf32, #tpu.memory_space<vmem>>, vector<1x64xf32>
    %16 = vector.broadcast %15 : vector<1x64xf32> to vector<2x64xf32>
    %17 = arith.mulf %14, %16 : vector<2x64xf32>
    %cst_12 = arith.constant dense<0.000000e+00> : vector<2xf32>
    %18 = vector.multi_reduction <add>, %17, %cst_12 [1] : vector<2x64xf32> to vector<2xf32>
    %19 = vector.shape_cast %18 : vector<2xf32> to vector<2x1xf32>
    %c0_13 = arith.constant 0 : index
    %20 = memref.load %arg6[%c0_13] : memref<1xf32, #tpu.memory_space<smem>>
    %21 = vector.broadcast %20 : f32 to vector<2x1xf32>
    %22 = arith.addf %19, %21 : vector<2x1xf32>
    %23 = arith.negf %22 : vector<2x1xf32>
    %24 = math.exp %23 : vector<2x1xf32>
    %cst_14 = arith.constant 1.000000e+00 : f32
    %25 = vector.broadcast %cst_14 : f32 to vector<2x1xf32>
    %26 = arith.addf %25, %24 : vector<2x1xf32>
    %27 = arith.divf %25, %26 : vector<2x1xf32>
    %c0_15 = arith.constant 0 : index
    %c0_16 = arith.constant 0 : index
    %28 = vector.load %arg7[%c0_15, %c0_16] : memref<2x1xf32, #tpu.memory_space<vmem>>, vector<2x1xf32>
    tpu.vector_store %arg7[%c0_15, %c0_16], %27 {strides = array<i32>} : memref<2x1xf32, #tpu.memory_space<vmem>>, vector<2x1xf32>,
    return
  }
  func.func @transform_0(%arg0: i32) -> (i32, i32) {
    %c0_i32 = arith.constant 0 : i32
    %c0_i32_0 = arith.constant 0 : i32
    return %arg0, %c0_i32 : i32, i32
  }
  func.func @transform_1(%arg0: i32) -> (i32, i32) {
    %c0_i32 = arith.constant 0 : i32
    %c0_i32_0 = arith.constant 0 : i32
    return %arg0, %c0_i32 : i32, i32
  }
  func.func @transform_2(%arg0: i32) -> (i32, i32) {
    %c0_i32 = arith.constant 0 : i32
    %c0_i32_0 = arith.constant 0 : i32
    %c0_i32_1 = arith.constant 0 : i32
    return %c0_i32, %c0_i32_0 : i32, i32
  }
  func.func @transform_3(%arg0: i32) -> (i32, i32) {
    %c0_i32 = arith.constant 0 : i32
    %c0_i32_0 = arith.constant 0 : i32
    %c0_i32_1 = arith.constant 0 : i32
    return %c0_i32, %c0_i32_0 : i32, i32
  }
  func.func @transform_4(%arg0: i32) -> (i32, i32) {
    %c0_i32 = arith.constant 0 : i32
    %c0_i32_0 = arith.constant 0 : i32
    %c0_i32_1 = arith.constant 0 : i32
    return %c0_i32, %c0_i32_0 : i32, i32
  }
  func.func @transform_5(%arg0: i32) -> i32 {
    %c0_i32 = arith.constant 0 : i32
    %c0_i32_0 = arith.constant 0 : i32
    return %c0_i32 : i32
  }
  func.func @transform_6(%arg0: i32) -> (i32, i32) {
    %c0_i32 = arith.constant 0 : i32
    %c0_i32_0 = arith.constant 0 : i32
    return %arg0, %c0_i32 : i32, i32
  }
}

</mosaic_0001>

<llo_original>
// kernel: tpu_custom_call.1
$region0: #{tpu_custom_call.1}
  #allocation0 [shape = 'u32[]', space=smem, size = 0x4, offset = 0x4, fixed_abs, tag = 'smem constant byte address 0x4 - core index']
  #allocation1 [shape = 'u32[144,128]{1,0:T(1,128)}', space=vmem, size = 0x12000, scoped, tag = 'internal scratch']
  #allocation2 [shape = 'f32[1]{0:T(128)S(6)}', space=smem, size = 0x200, scoped, tag = 'scoped memory for tpu_custom_call.1']
  %s0 = inlined_call_operand.vmem [shape: f32[2,768], index: 0, kind: input, shape index: {}]
  %s1 = inlined_call_operand.vmem [shape: f32[2,768], index: 1, kind: input, shape index: {}]
  %s2 = inlined_call_operand.vmem [shape: f32[768,64], index: 2, kind: input, shape index: {}]
  %s3 = inlined_call_operand.vmem [shape: f32[1,64], index: 3, kind: input, shape index: {}]
  %s4 = inlined_call_operand.vmem [shape: f32[1,64], index: 4, kind: input, shape index: {}]
  %s5 = inlined_call_operand.<no memory space> [shape: f32[1], index: 5, kind: input, shape index: {}]
  %s6 = inlined_call_operand.vmem [shape: f32[2,1], index: 6, kind: output, shape index: {}]
  %s7 = sld [smem:[#allocation0]]
  $region34: #{tpu_custom_call.1} parent=0
    _
  %s9 = ssub.s32 1, %s7
  %s10 = scalar_select 0, %s9, %s7
  %11 = sst [smem:[#allocation2]] %s5
  // Predicated region
  $region2: #{tpu_custom_call.1} parent=0 // pred_check
    _
  $region3: #{tpu_custom_call.1} parent=0 // pred_check_branch
    %13 = sbr.rel (0) target = $region5
  $region4: #{tpu_custom_call.1} parent=0 // pred_region
    _
  $region5: #{tpu_custom_call.1} parent=0 // pred_fallthru
    _
  // Predicated region
  $region6: #{tpu_custom_call.1} parent=0 // pred_check
    _
  $region7: #{tpu_custom_call.1} parent=0 // pred_check_branch
    %15 = sbr.rel (0) target = $region9
  $region8: #{tpu_custom_call.1} parent=0 // pred_region
    _
  $region9: #{tpu_custom_call.1} parent=0 // pred_fallthru
    _
  // Predicated region
  $region10: #{tpu_custom_call.1} parent=0 // pred_check
    _
  $region11: #{tpu_custom_call.1} parent=0 // pred_check_branch
    %17 = sbr.rel (0) target = $region13
  $region12: #{tpu_custom_call.1} parent=0 // pred_region
    _
  $region13: #{tpu_custom_call.1} parent=0 // pred_fallthru
    _
  // Predicated region
  $region14: #{tpu_custom_call.1} parent=0 // pred_check
    _
  $region15: #{tpu_custom_call.1} parent=0 // pred_check_branch
    %19 = sbr.rel (0) target = $region17
  $region16: #{tpu_custom_call.1} parent=0 // pred_region
    _
  $region17: #{tpu_custom_call.1} parent=0 // pred_fallthru
    _
  // Predicated region
  $region18: #{tpu_custom_call.1} parent=0 // pred_check
    _
  $region19: #{tpu_custom_call.1} parent=0 // pred_check_branch
    %21 = sbr.rel (0) target = $region21
  $region20: #{tpu_custom_call.1} parent=0 // pred_region
    _
  $region21: #{tpu_custom_call.1} parent=0 // pred_fallthru
    _
  // Predicated region
  $region22: #{tpu_custom_call.1} parent=0 // pred_check
    _
  $region23: #{tpu_custom_call.1} parent=0 // pred_check_branch
    %23 = sbr.rel (0) target = $region25
  $region24: #{tpu_custom_call.1} parent=0 // pred_region
    _
  $region25: #{tpu_custom_call.1} parent=0 // pred_fallthru
    _
  %v24 = vld [vmem:[%s2] sm:$0xff]
  %v25 = vld [vmem:[%s2 + $0x8] sm:$0xff]
  %v26 = vld [vmem:[%s2 + $0x10] sm:$0xff]
  %v27 = vld [vmem:[%s2 + $0x18] sm:$0xff]
  %v28 = vld [vmem:[%s2 + $0x20] sm:$0xff]
  %v29 = vld [vmem:[%s2 + $0x28] sm:$0xff]
  %v30 = vld [vmem:[%s2 + $0x30] sm:$0xff]
  %v31 = vld [vmem:[%s2 + $0x38] sm:$0xff]
  %v32 = vld [vmem:[%s2 + $0x40] sm:$0xff]
  %v33 = vld [vmem:[%s2 + $0x48] sm:$0xff]
  %v34 = vld [vmem:[%s2 + $0x50] sm:$0xff]
  %v35 = vld [vmem:[%s2 + $0x58] sm:$0xff]
  %v36 = vld [vmem:[%s2 + $0x60] sm:$0xff]
  %v37 = vld [vmem:[%s2 + $0x68] sm:$0xff]
  %v38 = vld [vmem:[%s2 + $0x70] sm:$0xff]
  %v39 = vld [vmem:[%s2 + $0x78] sm:$0xff]
  %v40 = vld [vmem:[%s2 + $0x80] sm:$0xff]
  %v41 = vld [vmem:[%s2 + $0x88] sm:$0xff]
  %v42 = vld [vmem:[%s2 + $0x90] sm:$0xff]
  %v43 = vld [vmem:[%s2 + $0x98] sm:$0xff]
  %v44 = vld [vmem:[%s2 + $0xa0] sm:$0xff]
  %v45 = vld [vmem:[%s2 + $0xa8] sm:$0xff]
  %v46 = vld [vmem:[%s2 + $0xb0] sm:$0xff]
  %v47 = vld [vmem:[%s2 + $0xb8] sm:$0xff]
  %v48 = vld [vmem:[%s2 + $0xc0] sm:$0xff]
  %v49 = vld [vmem:[%s2 + $0xc8] sm:$0xff]
  %v50 = vld [vmem:[%s2 + $0xd0] sm:$0xff]
  %v51 = vld [vmem:[%s2 + $0xd8] sm:$0xff]
  %v52 = vld [vmem:[%s2 + $0xe0] sm:$0xff]
  %v53 = vld [vmem:[%s2 + $0xe8] sm:$0xff]
  %v54 = vld [vmem:[%s2 + $0xf0] sm:$0xff]
  %v55 = vld [vmem:[%s2 + $0xf8] sm:$0xff]
  %v56 = vld [vmem:[%s2 + $0x100] sm:$0xff]
  %v57 = vld [vmem:[%s2 + $0x108] sm:$0xff]
  %v58 = vld [vmem:[%s2 + $0x110] sm:$0xff]
  %v59 = vld [vmem:[%s2 + $0x118] sm:$0xff]
  %v60 = vld [vmem:[%s2 + $0x120] sm:$0xff]
  %v61 = vld [vmem:[%s2 + $0x128] sm:$0xff]
  %v62 = vld [vmem:[%s2 + $0x130] sm:$0xff]
  %v63 = vld [vmem:[%s2 + $0x138] sm:$0xff]
  %v64 = vld [vmem:[%s2 + $0x140] sm:$0xff]
  %v65 = vld [vmem:[%s2 + $0x148] sm:$0xff]
  %v66 = vld [vmem:[%s2 + $0x150] sm:$0xff]
  %v67 = vld [vmem:[%s2 + $0x158] sm:$0xff]
  %v68 = vld [vmem:[%s2 + $0x160] sm:$0xff]
  %v69 = vld [vmem:[%s2 + $0x168] sm:$0xff]
  %v70 = vld [vmem:[%s2 + $0x170] sm:$0xff]
  %v71 = vld [vmem:[%s2 + $0x178] sm:$0xff]
  %v72 = vld [vmem:[%s2 + $0x180] sm:$0xff]
  %v73 = vld [vmem:[%s2 + $0x188] sm:$0xff]
  %v74 = vld [vmem:[%s2 + $0x190] sm:$0xff]
  %v75 = vld [vmem:[%s2 + $0x198] sm:$0xff]
  %v76 = vld [vmem:[%s2 + $0x1a0] sm:$0xff]
  %v77 = vld [vmem:[%s2 + $0x1a8] sm:$0xff]
  %v78 = vld [vmem:[%s2 + $0x1b0] sm:$0xff]
  %v79 = vld [vmem:[%s2 + $0x1b8] sm:$0xff]
  %v80 = vld [vmem:[%s2 + $0x1c0] sm:$0xff]
  %v81 = vld [vmem:[%s2 + $0x1c8] sm:$0xff]
  %v82 = vld [vmem:[%s2 + $0x1d0] sm:$0xff]
  %v83 = vld [vmem:[%s2 + $0x1d8] sm:$0xff]
  %v84 = vld [vmem:[%s2 + $0x1e0] sm:$0xff]
  %v85 = vld [vmem:[%s2 + $0x1e8] sm:$0xff]
  %v86 = vld [vmem:[%s2 + $0x1f0] sm:$0xff]
  %v87 = vld [vmem:[%s2 + $0x1f8] sm:$0xff]
  %v88 = vld [vmem:[%s2 + $0x200] sm:$0xff]
  %v89 = vld [vmem:[%s2 + $0x208] sm:$0xff]
  %v90 = vld [vmem:[%s2 + $0x210] sm:$0xff]
  %v91 = vld [vmem:[%s2 + $0x218] sm:$0xff]
  %v92 = vld [vmem:[%s2 + $0x220] sm:$0xff]
  %v93 = vld [vmem:[%s2 + $0x228] sm:$0xff]
  %v94 = vld [vmem:[%s2 + $0x230] sm:$0xff]
  %v95 = vld [vmem:[%s2 + $0x238] sm:$0xff]
  %v96 = vld [vmem:[%s2 + $0x240] sm:$0xff]
  %v97 = vld [vmem:[%s2 + $0x248] sm:$0xff]
  %v98 = vld [vmem:[%s2 + $0x250] sm:$0xff]
  %v99 = vld [vmem:[%s2 + $0x258] sm:$0xff]
  %v100 = vld [vmem:[%s2 + $0x260] sm:$0xff]
  %v101 = vld [vmem:[%s2 + $0x268] sm:$0xff]
  %v102 = vld [vmem:[%s2 + $0x270] sm:$0xff]
  %v103 = vld [vmem:[%s2 + $0x278] sm:$0xff]
  %v104 = vld [vmem:[%s2 + $0x280] sm:$0xff]
  %v105 = vld [vmem:[%s2 + $0x288] sm:$0xff]
  %v106 = vld [vmem:[%s2 + $0x290] sm:$0xff]
  %v107 = vld [vmem:[%s2 + $0x298] sm:$0xff]
  %v108 = vld [vmem:[%s2 + $0x2a0] sm:$0xff]
  %v109 = vld [vmem:[%s2 + $0x2a8] sm:$0xff]
  %v110 = vld [vmem:[%s2 + $0x2b0] sm:$0xff]
  %v111 = vld [vmem:[%s2 + $0x2b8] sm:$0xff]
  %v112 = vld [vmem:[%s2 + $0x2c0] sm:$0xff]
  %v113 = vld [vmem:[%s2 + $0x2c8] sm:$0xff]
  %v114 = vld [vmem:[%s2 + $0x2d0] sm:$0xff]
  %v115 = vld [vmem:[%s2 + $0x2d8] sm:$0xff]
  %v116 = vld [vmem:[%s2 + $0x2e0] sm:$0xff]
  %v117 = vld [vmem:[%s2 + $0x2e8] sm:$0xff]
  %v118 = vld [vmem:[%s2 + $0x2f0] sm:$0xff]
  %v119 = vld [vmem:[%s2 + $0x2f8] sm:$0xff]
  %v120 = vld [vmem:[%s0] sm:$0xff]
  %v121 = vld [vmem:[%s0 + $0x8] sm:$0xf]
  %v122 = vld [vmem:[%s1] sm:$0xff]
  %v123 = vld [vmem:[%s1 + $0x8] sm:$0xf]
  %v124 = vld [vmem:[%s3] sm:$0x1]
  %v126 = vlaneseq
  %v127 = vshrl.u32 %v126, 7
  %v128 = vsub.s32 0, %v127
  %v129 = vrot.slane %v124, %v128
  %v133 = vcombine.high %v120, %v120
  %v135 = vunpack.c.l.s4 1983009808
  %v136 = vunpack.c.0.s8 %v135
  %v137 = vlaneseq
  %v138 = vshrl.u32 %v137, 7
  %v139 = vsub.s32 %v136, %v138
  %v140 = vrot.slane %v120, %v139
  %v142 = vunpack.c.l.s4 1983009808
  %v143 = vunpack.c.0.s8 %v142
  %v144 = vlaneseq
  %v145 = vshrl.u32 %v144, 7
  %v146 = vsub.s32 %v143, %v145
  %v147 = vrot.slane %v133, %v146
  %v148 = vcombine.high %v140, %v140
  %v149 = vcombine.high %v147, %v147
  %v151 = vunpack.c.l.s4 1983009808
  %v152 = vunpack.c.0.s8 %v151
  %v153 = vlaneseq
  %v154 = vshrl.u32 %v153, 7
  %v155 = vsub.s32 %v152, %v154
  %v156 = vrot.slane %v121, %v155
  %v157 = vcombine.high %v156, %v156
  %164 = vmatprep.subr.mxu0 0.0
  %165 = vmatpush1.msra.mxu0 %v24
  %166 = vmatprep.subr.mxu0 0.0
  %167 = vmatpush1.msra.mxu0 %v25
  %168 = vmatprep.subr.mxu0 0.0
  %169 = vmatpush1.msra.mxu0 %v26
  %170 = vmatprep.subr.mxu0 0.0
  %171 = vmatpush1.msra.mxu0 %v27
  %172 = vmatprep.subr.mxu0 0.0
  %173 = vmatpush1.msra.mxu0 %v28
  %174 = vmatprep.subr.mxu0 0.0
  %175 = vmatpush1.msra.mxu0 %v29
  %176 = vmatprep.subr.mxu0 0.0
  %177 = vmatpush1.msra.mxu0 %v30
  %178 = vmatprep.subr.mxu0 0.0
  %179 = vmatpush1.msra.mxu0 %v31
  %180 = vmatprep.subr.mxu0 0.0
  %181 = vmatpush1.msra.mxu0 %v32
  %182 = vmatprep.subr.mxu0 0.0
  %183 = vmatpush1.msra.mxu0 %v33
  %184 = vmatprep.subr.mxu0 0.0
  %185 = vmatpush1.msra.mxu0 %v34
  %186 = vmatprep.subr.mxu0 0.0
  %187 = vmatpush1.msra.mxu0 %v35
  %188 = vmatprep.subr.mxu0 0.0
  %189 = vmatpush1.msra.mxu0 %v36
  %190 = vmatprep.subr.mxu0 0.0
  %191 = vmatpush1.msra.mxu0 %v37
  %192 = vmatprep.subr.mxu0 0.0
  %193 = vmatpush1.msra.mxu0 %v38
  %194 = vmatprep.subr.mxu0 0.0
  %195 = vmatpush1.msra.mxu0 %v39
  %196 = vmatprep.subr.mxu0 0.0
  %197 = vmatpush1.msra.mxu0 %v40
  %198 = vmatprep.subr.mxu0 0.0
  %199 = vmatpush1.msra.mxu0 %v41
  %200 = vmatprep.subr.mxu0 0.0
  %201 = vmatpush1.msra.mxu0 %v42
  %202 = vmatprep.subr.mxu0 0.0
  %203 = vmatpush1.msra.mxu0 %v43
  %204 = vmatprep.subr.mxu0 0.0
  %205 = vmatpush1.msra.mxu0 %v44
  %206 = vmatprep.subr.mxu0 0.0
  %207 = vmatpush1.msra.mxu0 %v45
  %208 = vmatprep.subr.mxu0 0.0
  %209 = vmatpush1.msra.mxu0 %v46
  %210 = vmatprep.subr.mxu0 0.0
  %211 = vmatpush1.msra.mxu0 %v47
  %212 = vmatprep.subr.mxu0 0.0
  %213 = vmatpush1.msra.mxu0 %v48
  %214 = vmatprep.subr.mxu0 0.0
  %215 = vmatpush1.msra.mxu0 %v49
  %216 = vmatprep.subr.mxu0 0.0
  %217 = vmatpush1.msra.mxu0 %v50
  %218 = vmatprep.subr.mxu0 0.0
  %219 = vmatpush1.msra.mxu0 %v51
  %220 = vmatprep.subr.mxu0 0.0
  %221 = vmatpush1.msra.mxu0 %v52
  %222 = vmatprep.subr.mxu0 0.0
  %223 = vmatpush1.msra.mxu0 %v53
  %224 = vmatprep.subr.mxu0 0.0
  %225 = vmatpush1.msra.mxu0 %v54
  %226 = vmatprep.subr.mxu0 0.0
  %227 = vmatpush1.msra.mxu0 %v55
  %228 = vmatprep.mubr.f32.mxu0 %v148
  %229 = vmatmul.mubr.f32.gmra.mrb[0].mxu0 %v140
  %v230 = vpop.f32.mrb[0].mxu0
  %v231 = vadd.f32 %v129, %v230
  %v232 = vpop.f32.mrb[0].mxu0
  %233 = vdwg.mxu0
  %234 = vmatprep.subr.mxu0 0.0
  %235 = vmatpush1.msra.mxu0 %v56
  %236 = vmatprep.subr.mxu0 0.0
  %237 = vmatpush1.msra.mxu0 %v57
  %238 = vmatprep.subr.mxu0 0.0
  %239 = vmatpush1.msra.mxu0 %v58
  %240 = vmatprep.subr.mxu0 0.0
  %241 = vmatpush1.msra.mxu0 %v59
  %242 = vmatprep.subr.mxu0 0.0
  %243 = vmatpush1.msra.mxu0 %v60
  %244 = vmatprep.subr.mxu0 0.0
  %245 = vmatpush1.msra.mxu0 %v61
  %246 = vmatprep.subr.mxu0 0.0
  %247 = vmatpush1.msra.mxu0 %v62
  %248 = vmatprep.subr.mxu0 0.0
  %249 = vmatpush1.msra.mxu0 %v63
  %250 = vmatprep.subr.mxu0 0.0
  %251 = vmatpush1.msra.mxu0 %v64
  %252 = vmatprep.subr.mxu0 0.0
  %253 = vmatpush1.msra.mxu0 %v65
  %254 = vmatprep.subr.mxu0 0.0
  %255 = vmatpush1.msra.mxu0 %v66
  %256 = vmatprep.subr.mxu0 0.0
  %257 = vmatpush1.msra.mxu0 %v67
  %258 = vmatprep.subr.mxu0 0.0
  %259 = vmatpush1.msra.mxu0 %v68
  %260 = vmatprep.subr.mxu0 0.0
  %261 = vmatpush1.msra.mxu0 %v69
  %262 = vmatprep.subr.mxu0 0.0
  %263 = vmatpush1.msra.mxu0 %v70
  %264 = vmatprep.subr.mxu0 0.0
  %265 = vmatpush1.msra.mxu0 %v71
  %266 = vmatprep.subr.mxu0 0.0
  %267 = vmatpush1.msra.mxu0 %v72
  %268 = vmatprep.subr.mxu0 0.0
  %269 = vmatpush1.msra.mxu0 %v73
  %270 = vmatprep.subr.mxu0 0.0
  %271 = vmatpush1.msra.mxu0 %v74
  %272 = vmatprep.subr.mxu0 0.0
  %273 = vmatpush1.msra.mxu0 %v75
  %274 = vmatprep.subr.mxu0 0.0
  %275 = vmatpush1.msra.mxu0 %v76
  %276 = vmatprep.subr.mxu0 0.0
  %277 = vmatpush1.msra.mxu0 %v77
  %278 = vmatprep.subr.mxu0 0.0
  %279 = vmatpush1.msra.mxu0 %v78
  %280 = vmatprep.subr.mxu0 0.0
  %281 = vmatpush1.msra.mxu0 %v79
  %282 = vmatprep.subr.mxu0 0.0
  %283 = vmatpush1.msra.mxu0 %v80
  %284 = vmatprep.subr.mxu0 0.0
  %285 = vmatpush1.msra.mxu0 %v81
  %286 = vmatprep.subr.mxu0 0.0
  %287 = vmatpush1.msra.mxu0 %v82
  %288 = vmatprep.subr.mxu0 0.0
  %289 = vmatpush1.msra.mxu0 %v83
  %290 = vmatprep.subr.mxu0 0.0
  %291 = vmatpush1.msra.mxu0 %v84
  %292 = vmatprep.subr.mxu0 0.0
  %293 = vmatpush1.msra.mxu0 %v85
  %294 = vmatprep.subr.mxu0 0.0
  %295 = vmatpush1.msra.mxu0 %v86
  %296 = vmatprep.subr.mxu0 0.0
  %297 = vmatpush1.msra.mxu0 %v87
  %298 = vmatprep.mubr.f32.mxu0 %v149
  %299 = vmatmul.mubr.f32.gmra.mrb[0].mxu0 %v147
  %v300 = vpop.f32.mrb[0].mxu0
  %v301 = vadd.f32 %v231, %v300
  %v302 = vpop.f32.mrb[0].mxu0
  %303 = vdwg.mxu0
  %304 = vmatprep.subr.mxu0 0.0
  %305 = vmatpush1.msra.mxu0 %v88
  %306 = vmatprep.subr.mxu0 0.0
  %307 = vmatpush1.msra.mxu0 %v89
  %308 = vmatprep.subr.mxu0 0.0
  %309 = vmatpush1.msra.mxu0 %v90
  %310 = vmatprep.subr.mxu0 0.0
  %311 = vmatpush1.msra.mxu0 %v91
  %312 = vmatprep.subr.mxu0 0.0
  %313 = vmatpush1.msra.mxu0 %v92
  %314 = vmatprep.subr.mxu0 0.0
  %315 = vmatpush1.msra.mxu0 %v93
  %316 = vmatprep.subr.mxu0 0.0
  %317 = vmatpush1.msra.mxu0 %v94
  %318 = vmatprep.subr.mxu0 0.0
  %319 = vmatpush1.msra.mxu0 %v95
  %320 = vmatprep.subr.mxu0 0.0
  %321 = vmatpush1.msra.mxu0 %v96
  %322 = vmatprep.subr.mxu0 0.0
  %323 = vmatpush1.msra.mxu0 %v97
  %324 = vmatprep.subr.mxu0 0.0
  %325 = vmatpush1.msra.mxu0 %v98
  %326 = vmatprep.subr.mxu0 0.0
  %327 = vmatpush1.msra.mxu0 %v99
  %328 = vmatprep.subr.mxu0 0.0
  %329 = vmatpush1.msra.mxu0 %v100
  %330 = vmatprep.subr.mxu0 0.0
  %331 = vmatpush1.msra.mxu0 %v101
  %332 = vmatprep.subr.mxu0 0.0
  %333 = vmatpush1.msra.mxu0 %v102
  %334 = vmatprep.subr.mxu0 0.0
  %335 = vmatpush1.msra.mxu0 %v103
  %336 = vmatprep.subr.mxu0 0.0
  %337 = vmatpush1.msra.mxu0 %v104
  %338 = vmatprep.subr.mxu0 0.0
  %339 = vmatpush1.msra.mxu0 %v105
  %340 = vmatprep.subr.mxu0 0.0
  %341 = vmatpush1.msra.mxu0 %v106
  %342 = vmatprep.subr.mxu0 0.0
  %343 = vmatpush1.msra.mxu0 %v107
  %344 = vmatprep.subr.mxu0 0.0
  %345 = vmatpush1.msra.mxu0 %v108
  %346 = vmatprep.subr.mxu0 0.0
  %347 = vmatpush1.msra.mxu0 %v109
  %348 = vmatprep.subr.mxu0 0.0
  %349 = vmatpush1.msra.mxu0 %v110
  %350 = vmatprep.subr.mxu0 0.0
  %351 = vmatpush1.msra.mxu0 %v111
  %352 = vmatprep.subr.mxu0 0.0
  %353 = vmatpush1.msra.mxu0 %v112
  %354 = vmatprep.subr.mxu0 0.0
  %355 = vmatpush1.msra.mxu0 %v113
  %356 = vmatprep.subr.mxu0 0.0
  %357 = vmatpush1.msra.mxu0 %v114
  %358 = vmatprep.subr.mxu0 0.0
  %359 = vmatpush1.msra.mxu0 %v115
  %360 = vmatprep.subr.mxu0 0.0
  %361 = vmatpush1.msra.mxu0 %v116
  %362 = vmatprep.subr.mxu0 0.0
  %363 = vmatpush1.msra.mxu0 %v117
  %364 = vmatprep.subr.mxu0 0.0
  %365 = vmatpush1.msra.mxu0 %v118
  %366 = vmatprep.subr.mxu0 0.0
  %367 = vmatpush1.msra.mxu0 %v119
  %368 = vmatprep.mubr.f32.mxu0 %v157
  %369 = vmatmul.mubr.f32.gmra.mrb[0].mxu0 %v156
  %v370 = vpop.f32.mrb[0].mxu0
  %v371 = vadd.f32 %v301, %v370
  %v372 = vpop.f32.mrb[0].mxu0
  %373 = vdwg.mxu0
  %v374 = vmax.f32 %v371, 0.0
  %v377 = vcombine.high %v122, %v122
  %v379 = vunpack.c.l.s4 1983009808
  %v380 = vunpack.c.0.s8 %v379
  %v381 = vlaneseq
  %v382 = vshrl.u32 %v381, 7
  %v383 = vsub.s32 %v380, %v382
  %v384 = vrot.slane %v122, %v383
  %v386 = vunpack.c.l.s4 1983009808
  %v387 = vunpack.c.0.s8 %v386
  %v388 = vlaneseq
  %v389 = vshrl.u32 %v388, 7
  %v390 = vsub.s32 %v387, %v389
  %v391 = vrot.slane %v377, %v390
  %v392 = vcombine.high %v384, %v384
  %v393 = vcombine.high %v391, %v391
  %v395 = vunpack.c.l.s4 1983009808
  %v396 = vunpack.c.0.s8 %v395
  %v397 = vlaneseq
  %v398 = vshrl.u32 %v397, 7
  %v399 = vsub.s32 %v396, %v398
  %v400 = vrot.slane %v123, %v399
  %v401 = vcombine.high %v400, %v400
  %408 = vmatprep.subr.mxu0 0.0
  %409 = vmatpush1.msra.mxu0 %v24
  %410 = vmatprep.subr.mxu0 0.0
  %411 = vmatpush1.msra.mxu0 %v25
  %412 = vmatprep.subr.mxu0 0.0
  %413 = vmatpush1.msra.mxu0 %v26
  %414 = vmatprep.subr.mxu0 0.0
  %415 = vmatpush1.msra.mxu0 %v27
  %416 = vmatprep.subr.mxu0 0.0
  %417 = vmatpush1.msra.mxu0 %v28
  %418 = vmatprep.subr.mxu0 0.0
  %419 = vmatpush1.msra.mxu0 %v29
  %420 = vmatprep.subr.mxu0 0.0
  %421 = vmatpush1.msra.mxu0 %v30
  %422 = vmatprep.subr.mxu0 0.0
  %423 = vmatpush1.msra.mxu0 %v31
  %424 = vmatprep.subr.mxu0 0.0
  %425 = vmatpush1.msra.mxu0 %v32
  %426 = vmatprep.subr.mxu0 0.0
  %427 = vmatpush1.msra.mxu0 %v33
  %428 = vmatprep.subr.mxu0 0.0
  %429 = vmatpush1.msra.mxu0 %v34
  %430 = vmatprep.subr.mxu0 0.0
  %431 = vmatpush1.msra.mxu0 %v35
  %432 = vmatprep.subr.mxu0 0.0
  %433 = vmatpush1.msra.mxu0 %v36
  %434 = vmatprep.subr.mxu0 0.0
  %435 = vmatpush1.msra.mxu0 %v37
  %436 = vmatprep.subr.mxu0 0.0
  %437 = vmatpush1.msra.mxu0 %v38
  %438 = vmatprep.subr.mxu0 0.0
  %439 = vmatpush1.msra.mxu0 %v39
  %440 = vmatprep.subr.mxu0 0.0
  %441 = vmatpush1.msra.mxu0 %v40
  %442 = vmatprep.subr.mxu0 0.0
  %443 = vmatpush1.msra.mxu0 %v41
  %444 = vmatprep.subr.mxu0 0.0
  %445 = vmatpush1.msra.mxu0 %v42
  %446 = vmatprep.subr.mxu0 0.0
  %447 = vmatpush1.msra.mxu0 %v43
  %448 = vmatprep.subr.mxu0 0.0
  %449 = vmatpush1.msra.mxu0 %v44
  %450 = vmatprep.subr.mxu0 0.0
  %451 = vmatpush1.msra.mxu0 %v45
  %452 = vmatprep.subr.mxu0 0.0
  %453 = vmatpush1.msra.mxu0 %v46
  %454 = vmatprep.subr.mxu0 0.0
  %455 = vmatpush1.msra.mxu0 %v47
  %456 = vmatprep.subr.mxu0 0.0
  %457 = vmatpush1.msra.mxu0 %v48
  %458 = vmatprep.subr.mxu0 0.0
  %459 = vmatpush1.msra.mxu0 %v49
  %460 = vmatprep.subr.mxu0 0.0
  %461 = vmatpush1.msra.mxu0 %v50
  %462 = vmatprep.subr.mxu0 0.0
  %463 = vmatpush1.msra.mxu0 %v51
  %464 = vmatprep.subr.mxu0 0.0
  %465 = vmatpush1.msra.mxu0 %v52
  %466 = vmatprep.subr.mxu0 0.0
  %467 = vmatpush1.msra.mxu0 %v53
  %468 = vmatprep.subr.mxu0 0.0
  %469 = vmatpush1.msra.mxu0 %v54
  %470 = vmatprep.subr.mxu0 0.0
  %471 = vmatpush1.msra.mxu0 %v55
  %472 = vmatprep.mubr.f32.mxu0 %v392
  %473 = vmatmul.mubr.f32.gmra.mrb[0].mxu0 %v384
  %v474 = vpop.f32.mrb[0].mxu0
  %v475 = vadd.f32 %v129, %v474
  %v476 = vpop.f32.mrb[0].mxu0
  %477 = vdwg.mxu0
  %478 = vmatprep.subr.mxu0 0.0
  %479 = vmatpush1.msra.mxu0 %v56
  %480 = vmatprep.subr.mxu0 0.0
  %481 = vmatpush1.msra.mxu0 %v57
  %482 = vmatprep.subr.mxu0 0.0
  %483 = vmatpush1.msra.mxu0 %v58
  %484 = vmatprep.subr.mxu0 0.0
  %485 = vmatpush1.msra.mxu0 %v59
  %486 = vmatprep.subr.mxu0 0.0
  %487 = vmatpush1.msra.mxu0 %v60
  %488 = vmatprep.subr.mxu0 0.0
  %489 = vmatpush1.msra.mxu0 %v61
  %490 = vmatprep.subr.mxu0 0.0
  %491 = vmatpush1.msra.mxu0 %v62
  %492 = vmatprep.subr.mxu0 0.0
  %493 = vmatpush1.msra.mxu0 %v63
  %494 = vmatprep.subr.mxu0 0.0
  %495 = vmatpush1.msra.mxu0 %v64
  %496 = vmatprep.subr.mxu0 0.0
  %497 = vmatpush1.msra.mxu0 %v65
  %498 = vmatprep.subr.mxu0 0.0
  %499 = vmatpush1.msra.mxu0 %v66
  %500 = vmatprep.subr.mxu0 0.0
  %501 = vmatpush1.msra.mxu0 %v67
  %502 = vmatprep.subr.mxu0 0.0
  %503 = vmatpush1.msra.mxu0 %v68
  %504 = vmatprep.subr.mxu0 0.0
  %505 = vmatpush1.msra.mxu0 %v69
  %506 = vmatprep.subr.mxu0 0.0
  %507 = vmatpush1.msra.mxu0 %v70
  %508 = vmatprep.subr.mxu0 0.0
  %509 = vmatpush1.msra.mxu0 %v71
  %510 = vmatprep.subr.mxu0 0.0
  %511 = vmatpush1.msra.mxu0 %v72
  %512 = vmatprep.subr.mxu0 0.0
  %513 = vmatpush1.msra.mxu0 %v73
  %514 = vmatprep.subr.mxu0 0.0
  %515 = vmatpush1.msra.mxu0 %v74
  %516 = vmatprep.subr.mxu0 0.0
  %517 = vmatpush1.msra.mxu0 %v75
  %518 = vmatprep.subr.mxu0 0.0
  %519 = vmatpush1.msra.mxu0 %v76
  %520 = vmatprep.subr.mxu0 0.0
  %521 = vmatpush1.msra.mxu0 %v77
  %522 = vmatprep.subr.mxu0 0.0
  %523 = vmatpush1.msra.mxu0 %v78
  %524 = vmatprep.subr.mxu0 0.0
  %525 = vmatpush1.msra.mxu0 %v79
  %526 = vmatprep.subr.mxu0 0.0
  %527 = vmatpush1.msra.mxu0 %v80
  %528 = vmatprep.subr.mxu0 0.0
  %529 = vmatpush1.msra.mxu0 %v81
  %530 = vmatprep.subr.mxu0 0.0
  %531 = vmatpush1.msra.mxu0 %v82
  %532 = vmatprep.subr.mxu0 0.0
  %533 = vmatpush1.msra.mxu0 %v83
  %534 = vmatprep.subr.mxu0 0.0
  %535 = vmatpush1.msra.mxu0 %v84
  %536 = vmatprep.subr.mxu0 0.0
  %537 = vmatpush1.msra.mxu0 %v85
  %538 = vmatprep.subr.mxu0 0.0
  %539 = vmatpush1.msra.mxu0 %v86
  %540 = vmatprep.subr.mxu0 0.0
  %541 = vmatpush1.msra.mxu0 %v87
  %542 = vmatprep.mubr.f32.mxu0 %v393
  %543 = vmatmul.mubr.f32.gmra.mrb[0].mxu0 %v391
  %v544 = vpop.f32.mrb[0].mxu0
  %v545 = vadd.f32 %v475, %v544
  %v546 = vpop.f32.mrb[0].mxu0
  %547 = vdwg.mxu0
  %548 = vmatprep.subr.mxu0 0.0
  %549 = vmatpush1.msra.mxu0 %v88
  %550 = vmatprep.subr.mxu0 0.0
  %551 = vmatpush1.msra.mxu0 %v89
  %552 = vmatprep.subr.mxu0 0.0
  %553 = vmatpush1.msra.mxu0 %v90
  %554 = vmatprep.subr.mxu0 0.0
  %555 = vmatpush1.msra.mxu0 %v91
  %556 = vmatprep.subr.mxu0 0.0
  %557 = vmatpush1.msra.mxu0 %v92
  %558 = vmatprep.subr.mxu0 0.0
  %559 = vmatpush1.msra.mxu0 %v93
  %560 = vmatprep.subr.mxu0 0.0
  %561 = vmatpush1.msra.mxu0 %v94
  %562 = vmatprep.subr.mxu0 0.0
  %563 = vmatpush1.msra.mxu0 %v95
  %564 = vmatprep.subr.mxu0 0.0
  %565 = vmatpush1.msra.mxu0 %v96
  %566 = vmatprep.subr.mxu0 0.0
  %567 = vmatpush1.msra.mxu0 %v97
  %568 = vmatprep.subr.mxu0 0.0
  %569 = vmatpush1.msra.mxu0 %v98
  %570 = vmatprep.subr.mxu0 0.0
  %571 = vmatpush1.msra.mxu0 %v99
  %572 = vmatprep.subr.mxu0 0.0
  %573 = vmatpush1.msra.mxu0 %v100
  %574 = vmatprep.subr.mxu0 0.0
  %575 = vmatpush1.msra.mxu0 %v101
  %576 = vmatprep.subr.mxu0 0.0
  %577 = vmatpush1.msra.mxu0 %v102
  %578 = vmatprep.subr.mxu0 0.0
  %579 = vmatpush1.msra.mxu0 %v103
  %580 = vmatprep.subr.mxu0 0.0
  %581 = vmatpush1.msra.mxu0 %v104
  %582 = vmatprep.subr.mxu0 0.0
  %583 = vmatpush1.msra.mxu0 %v105
  %584 = vmatprep.subr.mxu0 0.0
  %585 = vmatpush1.msra.mxu0 %v106
  %586 = vmatprep.subr.mxu0 0.0
  %587 = vmatpush1.msra.mxu0 %v107
  %588 = vmatprep.subr.mxu0 0.0
  %589 = vmatpush1.msra.mxu0 %v108
  %590 = vmatprep.subr.mxu0 0.0
  %591 = vmatpush1.msra.mxu0 %v109
  %592 = vmatprep.subr.mxu0 0.0
  %593 = vmatpush1.msra.mxu0 %v110
  %594 = vmatprep.subr.mxu0 0.0
  %595 = vmatpush1.msra.mxu0 %v111
  %596 = vmatprep.subr.mxu0 0.0
  %597 = vmatpush1.msra.mxu0 %v112
  %598 = vmatprep.subr.mxu0 0.0
  %599 = vmatpush1.msra.mxu0 %v113
  %600 = vmatprep.subr.mxu0 0.0
  %601 = vmatpush1.msra.mxu0 %v114
  %602 = vmatprep.subr.mxu0 0.0
  %603 = vmatpush1.msra.mxu0 %v115
  %604 = vmatprep.subr.mxu0 0.0
  %605 = vmatpush1.msra.mxu0 %v116
  %606 = vmatprep.subr.mxu0 0.0
  %607 = vmatpush1.msra.mxu0 %v117
  %608 = vmatprep.subr.mxu0 0.0
  %609 = vmatpush1.msra.mxu0 %v118
  %610 = vmatprep.subr.mxu0 0.0
  %611 = vmatpush1.msra.mxu0 %v119
  %612 = vmatprep.mubr.f32.mxu0 %v401
  %613 = vmatmul.mubr.f32.gmra.mrb[0].mxu0 %v400
  %v614 = vpop.f32.mrb[0].mxu0
  %v615 = vadd.f32 %v545, %v614
  %v616 = vpop.f32.mrb[0].mxu0
  %617 = vdwg.mxu0
  %v618 = vmax.f32 %v615, 0.0
  %v619 = vsub.f32 %v374, %v618
  %v620 = vld [vmem:[%s4] sm:$0x1]
  %v622 = vlaneseq
  %v623 = vshrl.u32 %v622, 7
  %v624 = vsub.s32 0, %v623
  %v625 = vrot.slane %v620, %v624
  %v627 = vmul.f32 %v619, %v625
  %vm628 = vcmask 517120
  %v629 = vsel %vm628, %v627, 0.0
  %630 = vadd.xlane.f32.xlu0 %v629
  %v631 = vpop.xlane.xlu0 %630
  %s632 = sld [smem:[#allocation2]]
  %v633 = vstv %s632
  %v634 = vadd.f32 %v631, %v633
  %v635 = vxor.u32 %v634, 2147483648
  %v636 = vmul.f32 %v635, 1.442695
  %v637 = vpow.pop %v636
  %v638 = vadd.f32 %v637, 1.0
  %v639 = vrcp.pop %v638
  %v640 = vmul.f32 1.0, %v639
  %vm641 = vcmask 1024
  %642 = vst.msk [vmem:[%s6] sm:$0x3] %vm641, %v640
  // Predicated region
  $region26: #{tpu_custom_call.1} parent=0 // pred_check
    _
  $region27: #{tpu_custom_call.1} parent=0 // pred_check_branch
    %644 = sbr.rel (0) target = $region29
  $region28: #{tpu_custom_call.1} parent=0 // pred_region
    _
  $region29: #{tpu_custom_call.1} parent=0 // pred_fallthru
    _
  // Predicated region
  $region30: #{tpu_custom_call.1} parent=0 // pred_check
    _
  $region31: #{tpu_custom_call.1} parent=0 // pred_check_branch
    %646 = sbr.rel (0) target = $region33
  $region32: #{tpu_custom_call.1} parent=0 // pred_region
    _
  $region33: #{tpu_custom_call.1} parent=0 // pred_fallthru
    _

</llo_original>
